<compile_context>
chip_gen: v7x
topology: tpu7x:2x2x1
jax: 0.10.0
libtpu: 0.0.40
codegen_flags: <defaults>
</compile_context>

<pallas_src>
import functools

import jax
import jax.numpy as jnp
import numpy as np
from jax import lax
from jax.experimental import pallas as pl
from jax.experimental.pallas import tpu as pltpu

QUANT_MIN = 0            # default quint8 MinMaxObserver
QUANT_MAX = 255
_F32_EPS = float(np.finfo(np.float32).eps)
FUSED_MAX_F32_BYTES = 4 << 20   # single fused pass when the f32 slab is <= this


# ---------------------------------------------------------------------------
# device / sizing helpers (all static / trace-time)
# ---------------------------------------------------------------------------
@functools.lru_cache(maxsize=None)
def _tpu_generation():
    try:
        kind = jax.devices()[0].device_kind.lower().replace(" ", "")
    except Exception:
        return 6
    for g in (7, 6, 5, 4):
        if f"v{g}" in kind or f"tpu{g}" in kind:
            return g
    return 6


@functools.lru_cache(maxsize=None)
def _hw_budgets():
    """(minmax tile bytes, fq tile bytes, vmem cap bytes) for this chip."""
    gen = _tpu_generation()
    if gen >= 7:     # 3.2 TB/s HBM, 64 MiB VMEM, 2 TensorCores
        mm_bytes, fq_bytes, cap = 6 << 20, 4 << 20, 48 << 20
    else:            # v5e / v6e: ~0.8-1.4 TB/s HBM, 128 MiB VMEM, 1 TC
        mm_bytes, fq_bytes, cap = 2 << 20, 2 << 20, 96 << 20
    try:             # refine against the real VMEM size when the query works
        phys = int(pltpu.get_tpu_info().vmem_capacity_bytes)
        cap = min(cap, (phys * 3) // 4)
    except Exception:
        pass
    return mm_bytes, fq_bytes, cap


def _round8(v):
    return max(8, ((v + 7) // 8) * 8)


def _vmem_need(tm, w, itemsize, n_stream):
    """Rough working-set estimate: n_stream double-buffered native-dtype blocks
    plus ~3 block-sized f32 temporaries (upcast + elementwise chain) + slack."""
    blk = tm * w
    return n_stream * 2 * blk * itemsize + 3 * blk * 4 + (2 << 20)


def _vmem_limit(need, cap):
    return int(min(cap, max(need + (8 << 20), 24 << 20)))


def _pick_width(n):
    """Widest lane-dense last dim that divides n (reshape-free)."""
    for w in (1024, 512, 256, 128):
        if n % w == 0:
            return w, False
    return 128, True     # ragged element count: rare pad path


def _pick_tile_rows(rows, w, itemsize, tile_bytes, cap, n_stream):
    tm = max(8, (tile_bytes // (itemsize * w)) // 8 * 8)
    # keep >= 4 grid steps when the tensor allows (pipelining + 2-TC sharding)
    tm = min(tm, _round8(-(-rows // 4)))
    # shrink until the estimated working set fits the per-generation VMEM budget
    while tm > 8 and _vmem_need(tm, w, itemsize, n_stream) > (cap * 4) // 5:
        tm = max(8, ((tm // 2) // 8) * 8)
    return min(tm, rows)


# ---------------------------------------------------------------------------
# shared numerics (usable on scalars outside kernels and (1,1) vectors inside)
# ---------------------------------------------------------------------------
def _qparams_from_minmax(min_val, max_val):
    """MinMaxObserver._calculate_qparams for per_tensor_affine / quint8."""
    min_neg = jnp.minimum(min_val, 0.0)
    max_pos = jnp.maximum(max_val, 0.0)
    scale = (max_pos - min_neg) / jnp.float32(QUANT_MAX - QUANT_MIN)
    scale = jnp.maximum(scale, jnp.float32(_F32_EPS))
    zp = jnp.float32(QUANT_MIN) - jnp.round(min_neg / scale)
    zp = jnp.clip(zp, jnp.float32(QUANT_MIN), jnp.float32(QUANT_MAX))
    return scale, zp      # zp as float; callers cast to int32 where needed


def _apply_fq(x_f32, scale, inv_scale, zp, out_dtype):
    q = jnp.clip(jnp.round(x_f32 * inv_scale + zp),
                 jnp.float32(QUANT_MIN), jnp.float32(QUANT_MAX))
    return ((q - zp) * scale).astype(out_dtype)


# ---------------------------------------------------------------------------
# Kernel A: fused observer + fake-quant (whole slab in one block)
# ---------------------------------------------------------------------------
def _fused_kernel(x_ref, o_ref, scale_ref, zp_ref):
    x = x_ref[...].astype(jnp.float32)
    mn = jnp.min(x, keepdims=True)           # (1, 1)
    mx = jnp.max(x, keepdims=True)
    scale, zp = _qparams_from_minmax(mn, mx)
    inv_scale = 1.0 / scale
    o_ref[...] = _apply_fq(x, scale, inv_scale, zp, o_ref.dtype)
    scale_ref[...] = scale
    zp_ref[...] = zp.astype(jnp.int32)


def _run_fused(x2d):
    rows, w = x2d.shape
    _, _, cap = _hw_budgets()
    vmem = _vmem_limit(_vmem_need(rows, w, x2d.dtype.itemsize, 2), cap)
    return pl.pallas_call(
        _fused_kernel,
        out_shape=(jax.ShapeDtypeStruct((rows, w), x2d.dtype),
                   jax.ShapeDtypeStruct((1, 1), jnp.float32),
                   jax.ShapeDtypeStruct((1, 1), jnp.int32)),
        grid_spec=pltpu.PrefetchScalarGridSpec(
            num_scalar_prefetch=0,
            grid=(1,),
            in_specs=[pl.BlockSpec((rows, w), lambda i: (0, 0))],
            out_specs=(pl.BlockSpec((rows, w), lambda i: (0, 0)),
                       pl.BlockSpec((1, 1), lambda i: (0, 0)),
                       pl.BlockSpec((1, 1), lambda i: (0, 0)))),
        compiler_params=pltpu.CompilerParams(
            dimension_semantics=("arbitrary",),
            vmem_limit_bytes=vmem),
    )(x2d)


# ---------------------------------------------------------------------------
# Kernel B: streaming per-tensor min/max (observer pass, large tensors),
#           2-way split over a leading "parallel" axis (both v7x TensorCores)
# ---------------------------------------------------------------------------
def _make_minmax_kernel(tm, w, rows, sub, offset, needs_mask):
    groups = tm // sub

    def _fold(min_sc, max_sc, x_min, x_max):
        if groups > 1:
            # layout-preserving fold: reduce over the major axis is pure VPU
            x_min = jnp.min(x_min.reshape(groups, sub, w), axis=0)
            x_max = jnp.max(x_max.reshape(groups, sub, w), axis=0)
        min_sc[...] = jnp.minimum(min_sc[...], x_min)
        max_sc[...] = jnp.maximum(max_sc[...], x_max)

    def kernel(x_ref, min_out, max_out, min_sc, max_sc):
        c = pl.program_id(0)
        i = pl.program_id(1)

        @pl.when(i == 0)
        def _():
            min_sc[...] = jnp.full((sub, w), jnp.inf, jnp.float32)
            max_sc[...] = jnp.full((sub, w), -jnp.inf, jnp.float32)

        x = x_ref[...].astype(jnp.float32)
        if not needs_mask:
            _fold(min_sc, max_sc, x, x)
        else:
            # mask work only on the (single) partial tile, full tiles stay cheap
            row0 = (c * offset + i) * tm
            full_tile = row0 + tm <= rows

            @pl.when(full_tile)
            def _():
                _fold(min_sc, max_sc, x, x)

            @pl.when(jnp.logical_not(full_tile))
            def _():
                rid = lax.broadcasted_iota(jnp.int32, (tm, w), 0) + row0
                ok = rid < rows
                _fold(min_sc, max_sc,
                      jnp.where(ok, x, jnp.inf),
                      jnp.where(ok, x, -jnp.inf))

        @pl.when(i == pl.num_programs(1) - 1)
        def _():
            # single cross-sublane/cross-lane reduction per split, at the end
            min_out[...] = jnp.min(min_sc[...], keepdims=True)
            max_out[...] = jnp.max(max_sc[...], keepdims=True)

    return kernel


def _run_minmax(x2d, tile_rows=None):
    rows, w = x2d.shape
    mm_bytes, _, cap = _hw_budgets()
    itemsize = x2d.dtype.itemsize
    tm = (min(int(tile_rows), rows) if tile_rows is not None
          else _pick_tile_rows(rows, w, itemsize, mm_bytes, cap, 1))
    n_tiles = pl.cdiv(rows, tm)
    n_split = 2 if n_tiles >= 2 else 1       # uses both TensorCores on v7x
    bps = pl.cdiv(n_tiles, n_split)
    offset = n_tiles - bps                   # split 1 covers the tail (one block may overlap)
    sub = 8 if tm % 8 == 0 else tm
    needs_mask = n_tiles * tm > rows
    kernel = _make_minmax_kernel(tm, w, rows, sub, offset, needs_mask)
    vmem = _vmem_limit(_vmem_need(tm, w, itemsize, 1), cap)
    return pl.pallas_call(
        kernel,
        out_shape=(jax.ShapeDtypeStruct((n_split, 1), jnp.float32),
                   jax.ShapeDtypeStruct((n_split, 1), jnp.float32)),
        grid_spec=pltpu.PrefetchScalarGridSpec(
            num_scalar_prefetch=0,
            grid=(n_split, bps),
            in_specs=[pl.BlockSpec((tm, w), lambda c, i: (c * offset + i, 0))],
            out_specs=(pl.BlockSpec((1, 1), lambda c, i: (c, 0)),
                       pl.BlockSpec((1, 1), lambda c, i: (c, 0))),
            scratch_shapes=[pltpu.VMEM((sub, w), jnp.float32),
                            pltpu.VMEM((sub, w), jnp.float32)]),
        compiler_params=pltpu.CompilerParams(
            dimension_semantics=("parallel", "arbitrary"),
            vmem_limit_bytes=vmem),
    )(x2d)


# ---------------------------------------------------------------------------
# Kernel C: fake-quant with qparams computed in-kernel from min/max partials
# ---------------------------------------------------------------------------
def _fq_from_stats_kernel(min_ref, max_ref, x_ref, o_ref):
    mn = jnp.min(min_ref[...], keepdims=True)     # (n_split,1) -> (1,1)
    mx = jnp.max(max_ref[...], keepdims=True)
    scale, zp = _qparams_from_minmax(mn, mx)
    inv_scale = 1.0 / scale
    x = x_ref[...].astype(jnp.float32)
    o_ref[...] = _apply_fq(x, scale, inv_scale, zp, o_ref.dtype)


def _run_fq_from_stats(x2d, min_part, max_part, tile_rows=None):
    rows, w = x2d.shape
    _, fq_bytes, cap = _hw_budgets()
    itemsize = x2d.dtype.itemsize
    tm = (min(int(tile_rows), rows) if tile_rows is not None
          else _pick_tile_rows(rows, w, itemsize, fq_bytes, cap, 2))
    n_split = min_part.shape[0]
    vmem = _vmem_limit(_vmem_need(tm, w, itemsize, 2), cap)
    return pl.pallas_call(
        _fq_from_stats_kernel,
        out_shape=jax.ShapeDtypeStruct((rows, w), x2d.dtype),
        grid_spec=pltpu.PrefetchScalarGridSpec(
            num_scalar_prefetch=0,
            grid=(pl.cdiv(rows, tm),),
            in_specs=[pl.BlockSpec((n_split, 1), lambda i: (0, 0)),
                      pl.BlockSpec((n_split, 1), lambda i: (0, 0)),
                      pl.BlockSpec((tm, w), lambda i: (i, 0))],
            out_specs=pl.BlockSpec((tm, w), lambda i: (i, 0))),
        compiler_params=pltpu.CompilerParams(
            dimension_semantics=("parallel",),
            vmem_limit_bytes=vmem),
    )(min_part, max_part, x2d)


# ---------------------------------------------------------------------------
# Kernel D: fake-quant with given scale / zero_point (observer disabled)
# ---------------------------------------------------------------------------
def _fq_from_qparams_kernel(qp_ref, x_ref, o_ref):
    scale = qp_ref[0]
    inv_scale = qp_ref[1]
    zp = qp_ref[2]
    x = x_ref[...].astype(jnp.float32)
    o_ref[...] = _apply_fq(x, scale, inv_scale, zp, o_ref.dtype)


def _run_fq_from_qparams(x2d, qparams, tile_rows=None):
    rows, w = x2d.shape
    _, fq_bytes, cap = _hw_budgets()
    itemsize = x2d.dtype.itemsize
    tm = (min(int(tile_rows), rows) if tile_rows is not None
          else _pick_tile_rows(rows, w, itemsize, fq_bytes, cap, 2))
    vmem = _vmem_limit(_vmem_need(tm, w, itemsize, 2), cap)
    return pl.pallas_call(
        _fq_from_qparams_kernel,
        out_shape=jax.ShapeDtypeStruct((rows, w), x2d.dtype),
        grid_spec=pltpu.PrefetchScalarGridSpec(
            num_scalar_prefetch=0,
            grid=(pl.cdiv(rows, tm),),
            in_specs=[pl.BlockSpec(memory_space=pltpu.MemorySpace.SMEM),
                      pl.BlockSpec((tm, w), lambda i: (i, 0))],
            out_specs=pl.BlockSpec((tm, w), lambda i: (i, 0))),
        compiler_params=pltpu.CompilerParams(
            dimension_semantics=("parallel",),
            vmem_limit_bytes=vmem),
    )(qparams, x2d)


# ---------------------------------------------------------------------------
# Glue: layout plumbing + FakeQuantize.forward
# ---------------------------------------------------------------------------
def _unpack(out2d, n, ragged, orig_shape):
    out_flat = out2d.reshape(-1)
    if ragged:
        out_flat = out_flat[:n]
    return out_flat.reshape(orig_shape)


def fake_quantize_forward(x, observer_enabled=True, fake_quant_enabled=True,
                          scale=None, zero_point=None,
                          tile_rows=None, fused_max_bytes=None):
    """FakeQuantize.forward (per-tensor affine). Returns (out, scale, zero_point)."""
    if scale is None:
        scale = jnp.ones((1,), jnp.float32)        # registered buffer init
    if zero_point is None:
        zero_point = jnp.zeros((1,), jnp.int32)    # registered buffer init

    orig_shape = x.shape
    n = int(np.prod(orig_shape)) if len(orig_shape) else 1
    if n == 0 or (not observer_enabled and not fake_quant_enabled):
        return x, scale, zero_point

    x_flat = x.reshape(-1)                          # native dtype, free reshape
    w, ragged = _pick_width(n)
    if ragged:
        # TODO(synk): pads via concatenate (one extra HBM copy); an in-kernel
        # flat-index mask on a 1-D tail block would remove this rare-path copy.
        n_pad = pl.cdiv(n, w) * w
        x_flat = jnp.concatenate(
            [x_flat, jnp.full((n_pad - n,), x_flat[0], x_flat.dtype)])
    rows = x_flat.shape[0] // w
    x2d = x_flat.reshape(rows, w)

    fused_cap = FUSED_MAX_F32_BYTES if fused_max_bytes is None else int(fused_max_bytes)
    if (observer_enabled and fake_quant_enabled and tile_rows is None
            and rows * w * 4 <= fused_cap):
        # single fused pass: one HBM read, one write, qparams computed in-kernel
        out2d, s11, zp11 = _run_fused(x2d)
        return (_unpack(out2d, n, ragged, orig_shape),
                s11.reshape(1), zp11.reshape(1))

    min_part = max_part = None
    if observer_enabled:
        min_part, max_part = _run_minmax(x2d, tile_rows)
        # tiny buffer-update math; runs concurrently with the fq kernel below
        s, zpf = _qparams_from_minmax(jnp.min(min_part), jnp.max(max_part))
        scale = s.reshape(1).astype(jnp.float32)
        zero_point = zpf.astype(jnp.int32).reshape(1)

    out = x
    if fake_quant_enabled:
        if observer_enabled:
            out2d = _run_fq_from_stats(x2d, min_part, max_part, tile_rows)
        else:
            qparams = jnp.stack([scale[0].astype(jnp.float32),
                                 (1.0 / scale[0]).astype(jnp.float32),
                                 zero_point[0].astype(jnp.float32)])
            out2d = _run_fq_from_qparams(x2d, qparams, tile_rows)
        out = _unpack(out2d, n, ragged, orig_shape)

    return out, scale, zero_point


# ---------------------------------------------------------------------------
# plain-JAX references + robust checks
# ---------------------------------------------------------------------------
def _reference(x):
    xf = x.astype(jnp.float32)
    s, zpf = _qparams_from_minmax(jnp.min(xf), jnp.max(xf))
    inv = 1.0 / s
    q = jnp.clip(jnp.round(xf * inv + zpf), QUANT_MIN, QUANT_MAX)
    out = ((q - zpf) * s).astype(x.dtype)
    return np.asarray(out), float(np.asarray(s)), int(np.asarray(zpf))


def _reference_fq(x, scale, zero_point):
    xf = x.astype(jnp.float32)
    s = jnp.float32(scale)
    zpf = jnp.float32(zero_point)
    q = jnp.clip(jnp.round(xf * (1.0 / s) + zpf), QUANT_MIN, QUANT_MAX)
    return np.asarray(((q - zpf) * s).astype(x.dtype))


def _assert_close_fq(out, ref_out, scale):
    out = np.asarray(out, np.float64)
    ref = np.asarray(ref_out, np.float64)
    diff = np.abs(out - ref)
    # every element within one quantisation step (catches scale/zp/clip/round bugs)
    assert diff.max() <= 1.01 * scale + 1e-6, diff.max()
    # essentially all elements tight (tolerates ulp-level round-boundary flips
    # between the in-kernel divide and the XLA reference divide)
    loose = float(np.mean(diff > 1e-5 + 1e-5 * np.abs(ref)))
    assert loose <= 1e-3, loose


def _check(x, **kwargs):
    out, scale, zero_point = fake_quantize_forward(x, **kwargs)
    out = jax.block_until_ready(out)
    ref_out, ref_s, ref_zp = _reference(x)
    s = float(np.asarray(scale)[0])
    np.testing.assert_allclose(s, ref_s, rtol=1e-5)
    assert int(np.asarray(zero_point)[0]) == ref_zp
    _assert_close_fq(out, ref_out, s)


if __name__ == "__main__":
    key = jax.random.PRNGKey(0)
    k1, k2, k3, k4, k5 = jax.random.split(key, 5)

    # 1) primary NCHW activation -> fused single-pass kernel
    _check(jax.random.normal(k1, (2, 4, 16, 16), jnp.float32) * 3.0 + 0.5)

    # 2) two-pass path: 2-way observer split, multi-step grid, grouped fold
    _check(jax.random.normal(k2, (8, 8, 32, 128), jnp.float32) * 2.0,
           fused_max_bytes=0)

    # 3) two-pass path with ragged row-tiles (partial last tile + overlapped split)
    _check(jax.random.normal(k3, (2, 3, 16, 44), jnp.float32) * 2.0 - 1.0,
           fused_max_bytes=0, tile_rows=8)

    # 4) element count not a multiple of 128 -> (rare) pad path, fused
    _check(jax.random.normal(k4, (3, 5, 7), jnp.float32))

    # 5) observer disabled: fake-quant with provided qparams
    x5 = jax.random.normal(k5, (2, 4, 16, 16), jnp.float32)
    s5 = jnp.asarray([0.05], jnp.float32)
    z5 = jnp.asarray([17], jnp.int32)
    out5, s5o, z5o = fake_quantize_forward(
        x5, observer_enabled=False, scale=s5, zero_point=z5)
    out5 = jax.block_until_ready(out5)
    _assert_close_fq(out5, _reference_fq(x5, 0.05, 17), 0.05)
    np.testing.assert_allclose(np.asarray(s5o), [0.05], rtol=1e-7)
    assert int(np.asarray(z5o)[0]) == 17

    # 6) observer only (fake-quant disabled): buffers update, output unchanged
    x6 = jax.random.normal(k1, (2, 4, 16, 16), jnp.float32)
    out6, s6, z6 = fake_quantize_forward(x6, fake_quant_enabled=False,
                                         fused_max_bytes=0)
    jax.block_until_ready(out6)
    _, rs6, rz6 = _reference(x6)
    np.testing.assert_allclose(float(np.asarray(s6)[0]), rs6, rtol=1e-5)
    assert int(np.asarray(z6)[0]) == rz6
    assert np.array_equal(np.asarray(out6), np.asarray(x6))

    print("KERNEL_OK")
</pallas_src>

<mosaic_0001>
module attributes {stable_mosaic.version = 11 : i64} {
  func.func @_fused_kernel(%arg0: i32, %arg1: memref<2x1024xf32, #tpu.memory_space<vmem>>, %arg2: memref<2x1024xf32, #tpu.memory_space<vmem>>, %arg3: memref<1x1xf32, #tpu.memory_space<vmem>>, %arg4: memref<1x1xi32, #tpu.memory_space<vmem>>) attributes {dimension_semantics = [#tpu.dimension_semantics<arbitrary>], iteration_bounds = array<i64: 1>, scalar_prefetch = 0 : i64, scratch_operands = 0 : i64, tpu.core_type = #tpu.core_type<tc>, window_params = [{pipeline_mode = #tpu.pipeline_mode<synchronous>, transform_indices = @transform_0, window_bounds = array<i64: 2, 1024>}, {pipeline_mode = #tpu.pipeline_mode<synchronous>, transform_indices = @transform_1, window_bounds = array<i64: 2, 1024>}, {pipeline_mode = #tpu.pipeline_mode<synchronous>, transform_indices = @transform_2, window_bounds = array<i64: 1, 1>}, {pipeline_mode = #tpu.pipeline_mode<synchronous>, transform_indices = @transform_3, window_bounds = array<i64: 1, 1>}]} {
    %c0 = arith.constant 0 : index
    %c0_0 = arith.constant 0 : index
    %0 = vector.load %arg1[%c0, %c0_0] : memref<2x1024xf32, #tpu.memory_space<vmem>>, vector<2x1024xf32>
    %1 = vector.shape_cast %0 : vector<2x1024xf32> to vector<1x2x1024xf32>
    %cst = arith.constant dense<0x7F800000> : vector<1xf32>
    %2 = vector.multi_reduction <minimumf>, %1, %cst [1, 2] : vector<1x2x1024xf32> to vector<1xf32>
    %3 = vector.shape_cast %2 : vector<1xf32> to vector<1x1x1xf32>
    %4 = vector.extract %3[0, 0, 0] : f32 from vector<1x1x1xf32>
    %5 = vector.broadcast %4 : f32 to vector<1x1xf32>
    %6 = vector.shape_cast %0 : vector<2x1024xf32> to vector<1x2x1024xf32>
    %cst_1 = arith.constant dense<0xFF800000> : vector<1xf32>
    %7 = vector.multi_reduction <maximumf>, %6, %cst_1 [1, 2] : vector<1x2x1024xf32> to vector<1xf32>
    %8 = vector.shape_cast %7 : vector<1xf32> to vector<1x1x1xf32>
    %9 = vector.extract %8[0, 0, 0] : f32 from vector<1x1x1xf32>
    %10 = vector.broadcast %9 : f32 to vector<1x1xf32>
    %cst_2 = arith.constant 0.000000e+00 : f32
    %11 = vector.broadcast %cst_2 : f32 to vector<1x1xf32>
    %12 = arith.minimumf %5, %11 : vector<1x1xf32>
    %cst_3 = arith.constant 0.000000e+00 : f32
    %13 = vector.broadcast %cst_3 : f32 to vector<1x1xf32>
    %14 = arith.maximumf %10, %13 : vector<1x1xf32>
    %15 = arith.subf %14, %12 : vector<1x1xf32>
    %cst_4 = arith.constant 2.550000e+02 : f32
    %16 = vector.broadcast %cst_4 : f32 to vector<1x1xf32>
    %17 = arith.divf %15, %16 : vector<1x1xf32>
    %cst_5 = arith.constant 1.1920929E-7 : f32
    %18 = vector.broadcast %cst_5 : f32 to vector<1x1xf32>
    %19 = arith.maximumf %17, %18 : vector<1x1xf32>
    %20 = arith.divf %12, %19 : vector<1x1xf32>
    %21 = math.roundeven %20 : vector<1x1xf32>
    %cst_6 = arith.constant 0.000000e+00 : f32
    %22 = vector.broadcast %cst_6 : f32 to vector<1x1xf32>
    %23 = arith.subf %22, %21 : vector<1x1xf32>
    %cst_7 = arith.constant 0.000000e+00 : f32
    %cst_8 = arith.constant 2.550000e+02 : f32
    %24 = vector.broadcast %cst_7 : f32 to vector<1x1xf32>
    %25 = arith.maximumf %24, %23 : vector<1x1xf32>
    %26 = vector.broadcast %cst_8 : f32 to vector<1x1xf32>
    %27 = arith.minimumf %26, %25 : vector<1x1xf32>
    %cst_9 = arith.constant 1.000000e+00 : f32
    %28 = vector.broadcast %cst_9 : f32 to vector<1x1xf32>
    %29 = arith.divf %28, %19 : vector<1x1xf32>
    %30 = vector.broadcast %29 : vector<1x1xf32> to vector<2x1024xf32>
    %31 = arith.mulf %0, %30 : vector<2x1024xf32>
    %32 = vector.broadcast %27 : vector<1x1xf32> to vector<2x1024xf32>
    %33 = arith.addf %31, %32 : vector<2x1024xf32>
    %34 = math.roundeven %33 : vector<2x1024xf32>
    %cst_10 = arith.constant 0.000000e+00 : f32
    %cst_11 = arith.constant 2.550000e+02 : f32
    %35 = vector.broadcast %cst_10 : f32 to vector<2x1024xf32>
    %36 = arith.maximumf %35, %34 : vector<2x1024xf32>
    %37 = vector.broadcast %cst_11 : f32 to vector<2x1024xf32>
    %38 = arith.minimumf %37, %36 : vector<2x1024xf32>
    %39 = vector.broadcast %27 : vector<1x1xf32> to vector<2x1024xf32>
    %40 = arith.subf %38, %39 : vector<2x1024xf32>
    %41 = vector.broadcast %19 : vector<1x1xf32> to vector<2x1024xf32>
    %42 = arith.mulf %40, %41 : vector<2x1024xf32>
    %c0_12 = arith.constant 0 : index
    %c0_13 = arith.constant 0 : index
    %43 = vector.load %arg2[%c0_12, %c0_13] : memref<2x1024xf32, #tpu.memory_space<vmem>>, vector<2x1024xf32>
    tpu.vector_store %arg2[%c0_12, %c0_13], %42 {strides = array<i32>} : memref<2x1024xf32, #tpu.memory_space<vmem>>, vector<2x1024xf32>,
    %c0_14 = arith.constant 0 : index
    %c0_15 = arith.constant 0 : index
    %44 = vector.load %arg3[%c0_14, %c0_15] : memref<1x1xf32, #tpu.memory_space<vmem>>, vector<1x1xf32>
    tpu.vector_store %arg3[%c0_14, %c0_15], %19 {strides = array<i32>} : memref<1x1xf32, #tpu.memory_space<vmem>>, vector<1x1xf32>,
    %45 = arith.fptosi %27 : vector<1x1xf32> to vector<1x1xi32>
    %c0_16 = arith.constant 0 : index
    %c0_17 = arith.constant 0 : index
    %46 = vector.load %arg4[%c0_16, %c0_17] : memref<1x1xi32, #tpu.memory_space<vmem>>, vector<1x1xi32>
    tpu.vector_store %arg4[%c0_16, %c0_17], %45 {strides = array<i32>} : memref<1x1xi32, #tpu.memory_space<vmem>>, vector<1x1xi32>,
    return
  }
  func.func @transform_0(%arg0: i32) -> (i32, i32) {
    %c0_i32 = arith.constant 0 : i32
    %c0_i32_0 = arith.constant 0 : i32
    %c0_i32_1 = arith.constant 0 : i32
    return %c0_i32, %c0_i32_0 : i32, i32
  }
  func.func @transform_1(%arg0: i32) -> (i32, i32) {
    %c0_i32 = arith.constant 0 : i32
    %c0_i32_0 = arith.constant 0 : i32
    %c0_i32_1 = arith.constant 0 : i32
    return %c0_i32, %c0_i32_0 : i32, i32
  }
  func.func @transform_2(%arg0: i32) -> (i32, i32) {
    %c0_i32 = arith.constant 0 : i32
    %c0_i32_0 = arith.constant 0 : i32
    %c0_i32_1 = arith.constant 0 : i32
    return %c0_i32, %c0_i32_0 : i32, i32
  }
  func.func @transform_3(%arg0: i32) -> (i32, i32) {
    %c0_i32 = arith.constant 0 : i32
    %c0_i32_0 = arith.constant 0 : i32
    %c0_i32_1 = arith.constant 0 : i32
    return %c0_i32, %c0_i32_0 : i32, i32
  }
}

</mosaic_0001>

<llo_original>
// kernel: tpu_custom_call.1
$region0: #{tpu_custom_call.1}
  #allocation0 [shape = 'u32[]', space=smem, size = 0x4, offset = 0x4, fixed_abs, tag = 'smem constant byte address 0x4 - core index']
  #allocation1 [shape = 'u32[144,128]{1,0:T(1,128)}', space=vmem, size = 0x12000, scoped, tag = 'internal scratch']
  %s0 = inlined_call_operand.hbm [shape: f32[2,1024], index: 0, kind: input, shape index: {}]
  %s1 = inlined_call_operand.hbm [shape: f32[2,1024], index: 1, kind: output, shape index: {0}]
  %s2 = inlined_call_operand.hbm [shape: f32[1,1], index: 2, kind: output, shape index: {1}]
  %s3 = inlined_call_operand.hbm [shape: s32[1,1], index: 3, kind: output, shape index: {2}]
  %4 = xla_tuple %s1, %s2, %s3
  %s5 = sld [smem:[#allocation0]]
  $region34: #{tpu_custom_call.1} parent=0
    _
  %s7 = ssub.s32 1, %s5
  %s8 = scalar_select 0, %s7, %s5
  $region1: #{tpu_custom_call.1} parent=0
    #allocation2 [shape = 'u8[8192]{0}', space=vmem, size = 0x2000, scoped, tag = 'input window, operand 0, single buffered']
    #allocation3 [shape = 's32[1]{0}', space=sflag, size = 0x4, scoped, tag = 'scoped memory for tpu_custom_call.1']
    #allocation4 [shape = 's32[1]{0}', space=sflag, size = 0x4, scoped, tag = 'scoped memory for tpu_custom_call.1']
    #allocation5 [shape = 'u8[8192]{0}', space=vmem, size = 0x2000, scoped, tag = 'output window, operand 0, single buffered']
    #allocation6 [shape = 'u8[512]{0}', space=vmem, size = 0x400, scoped, tag = 'output window, operand 1, single buffered']
    #allocation7 [shape = 's32[1]{0}', space=sflag, size = 0x4, scoped, tag = 'scoped memory for tpu_custom_call.1']
    #allocation8 [shape = 'u8[512]{0}', space=vmem, size = 0x400, scoped, tag = 'output window, operand 2, single buffered']
    %9 = vsyncpa [#allocation3], 0
    %10 = vsyncpa [#allocation4], 0
    %11 = vsyncpa [#allocation7], 0
    // Predicated region
    $region2: #{tpu_custom_call.1} parent=1 // pred_check
      _
    $region3: #{tpu_custom_call.1} parent=1 // pred_check_branch
      %13 = sbr.rel (0) target = $region5
    $region4: #{tpu_custom_call.1} parent=1 // pred_region
      %s15 = ssub.s32 256, 256
      %16 = vsyncadd [#allocation3], %s15
      %s18 = sshll.u32 [#allocation2], 4
      %s19 = int_to_ptr.vmem [resolvable:$true] %s18
      %21 = dma.hbm_to_vmem [thread:$0]  %s0, 256, %s19, [#allocation3]
    $region5: #{tpu_custom_call.1} parent=1 // pred_fallthru
      _
    // Predicated region
    $region6: #{tpu_custom_call.1} parent=1 // pred_check
      _
    $region7: #{tpu_custom_call.1} parent=1 // pred_check_branch
      %23 = sbr.rel (0) target = $region9
    $region8: #{tpu_custom_call.1} parent=1 // pred_region
      %24 = dma.done [#allocation3], 256
    $region9: #{tpu_custom_call.1} parent=1 // pred_fallthru
      _
    %v25 = vld [vmem:[#allocation2] sm:$0xff]
    %v26 = vld [vmem:[#allocation2 + $0x8] sm:$0xff]
    %v29 = vcombine.high %v25, %v25
    %v31 = vunpack.c.l.s4 1983009808
    %v32 = vunpack.c.0.s8 %v31
    %v33 = vlaneseq
    %v34 = vshrl.u32 %v33, 7
    %v35 = vsub.s32 %v32, %v34
    %v36 = vrot.slane %v25, %v35
    %v38 = vunpack.c.l.s4 1983009808
    %v39 = vunpack.c.0.s8 %v38
    %v40 = vlaneseq
    %v41 = vshrl.u32 %v40, 7
    %v42 = vsub.s32 %v39, %v41
    %v43 = vrot.slane %v29, %v42
    %v44 = vcombine.high %v36, %v36
    %v45 = vcombine.high %v43, %v43
    %v46 = vcombine.high %v26, %v26
    %v48 = vunpack.c.l.s4 1983009808
    %v49 = vunpack.c.0.s8 %v48
    %v50 = vlaneseq
    %v51 = vshrl.u32 %v50, 7
    %v52 = vsub.s32 %v49, %v51
    %v53 = vrot.slane %v26, %v52
    %v55 = vunpack.c.l.s4 1983009808
    %v56 = vunpack.c.0.s8 %v55
    %v57 = vlaneseq
    %v58 = vshrl.u32 %v57, 7
    %v59 = vsub.s32 %v56, %v58
    %v60 = vrot.slane %v46, %v59
    %v61 = vcombine.high %v53, %v53
    %v62 = vcombine.high %v60, %v60
    %vm71 = vcmask 1041408
    %v72 = vsel %vm71, %v36, inf
    %v73 = vsel %vm71, %v44, inf
    %v74 = vsel %vm71, %v43, inf
    %v75 = vsel %vm71, %v45, inf
    %v76 = vsel %vm71, %v53, inf
    %v77 = vmin.f32 %v72, %v76
    %v78 = vsel %vm71, %v61, inf
    %v79 = vmin.f32 %v73, %v78
    %v80 = vsel %vm71, %v60, inf
    %v81 = vmin.f32 %v74, %v80
    %v82 = vsel %vm71, %v62, inf
    %v83 = vmin.f32 %v75, %v82
    %v84 = vmin.f32 %v77, %v79
    %v85 = vmin.f32 %v81, %v83
    %v86 = vmin.f32 %v84, %v85
    %87 = vmin.xlane.f32.xlu0 %v86
    %v88 = vpop.xlane.xlu0 %87
    %v89 = vrot.slane %v88, 4
    %v90 = vmin.f32 %v88, %v89
    %v91 = vrot.slane %v90, 2
    %v92 = vmin.f32 %v90, %v91
    %v93 = vrot.slane %v92, 1
    %v94 = vmin.f32 %v92, %v93
    %s95 = vtos %v94
    %v96 = vstv %s95
    %v97 = vsel %vm71, %v36, -inf
    %v98 = vsel %vm71, %v44, -inf
    %v99 = vsel %vm71, %v43, -inf
    %v100 = vsel %vm71, %v45, -inf
    %v101 = vsel %vm71, %v53, -inf
    %v102 = vmax.f32 %v97, %v101
    %v103 = vsel %vm71, %v61, -inf
    %v104 = vmax.f32 %v98, %v103
    %v105 = vsel %vm71, %v60, -inf
    %v106 = vmax.f32 %v99, %v105
    %v107 = vsel %vm71, %v62, -inf
    %v108 = vmax.f32 %v100, %v107
    %v109 = vmax.f32 %v102, %v104
    %v110 = vmax.f32 %v106, %v108
    %v111 = vmax.f32 %v109, %v110
    %112 = vmax.xlane.f32.xlu0 %v111
    %v113 = vpop.xlane.xlu0 %112
    %v114 = vrot.slane %v113, 4
    %v115 = vmax.f32 %v113, %v114
    %v116 = vrot.slane %v115, 2
    %v117 = vmax.f32 %v115, %v116
    %v118 = vrot.slane %v117, 1
    %v119 = vmax.f32 %v117, %v118
    %s120 = vtos %v119
    %v121 = vstv %s120
    %v122 = vmin.f32 %v96, 0.0
    %v123 = vmax.f32 %v121, 0.0
    %v124 = vsub.f32 %v123, %v122
    %v125 = vrcp.pop 255.0
    %v126 = vmul.f32 %v124, %v125
    %v127 = vmax.f32 %v126, 1.1920929e-07
    %v128 = vrcp.pop %v127
    %v129 = vmul.f32 %v122, %v128
    %v130 = vround.ne.pseudo %v129
    %v131 = vsub.f32 0.0, %v130
    %v132 = vmax.f32 %v131, 0.0
    %v133 = vmin.f32 %v132, 255.0
    %v134 = vmul.f32 1.0, %v128
    %v135 = vmul.f32 %v25, %v134
    %v136 = vmul.f32 %v26, %v134
    %v137 = vadd.f32 %v135, %v133
    %v138 = vadd.f32 %v136, %v133
    %v139 = vround.ne.pseudo %v137
    %v140 = vround.ne.pseudo %v138
    %v141 = vmax.f32 %v139, 0.0
    %v142 = vmax.f32 %v140, 0.0
    %v143 = vmin.f32 %v141, 255.0
    %v144 = vmin.f32 %v142, 255.0
    %v145 = vsub.f32 %v143, %v133
    %v146 = vsub.f32 %v144, %v133
    %v147 = vmul.f32 %v145, %v127
    %v148 = vmul.f32 %v146, %v127
    %149 = vst [vmem:[#allocation5] sm:$0xff] %v147
    %150 = vst [vmem:[#allocation5 + $0x8] sm:$0xff] %v148
    %vm151 = vcmask 0
    %152 = vst.msk [vmem:[#allocation6] sm:$0x1] %vm151, %v127
    %v153 = vcvt.f32.s32.to.zero.pseudo %v133
    %154 = vst.msk [vmem:[#allocation8] sm:$0x1] %vm151, %v153
    // Predicated region
    $region10: #{tpu_custom_call.1} parent=1 // pred_check
      _
    $region11: #{tpu_custom_call.1} parent=1 // pred_check_branch
      %156 = sbr.rel (0) target = $region13
    $region12: #{tpu_custom_call.1} parent=1 // pred_region
      %s158 = ssub.s32 256, 256
      %159 = vsyncadd [#allocation4], %s158
      %s161 = sshll.u32 [#allocation5], 4
      %s162 = int_to_ptr.vmem [resolvable:$true] %s161
      %164 = dma.vmem_to_hbm [thread:$0]  %s162, 256, %s1, [#allocation4]
    $region13: #{tpu_custom_call.1} parent=1 // pred_fallthru
      _
    // Predicated region
    $region14: #{tpu_custom_call.1} parent=1 // pred_check
      _
    $region15: #{tpu_custom_call.1} parent=1 // pred_check_branch
      %166 = sbr.rel (0) target = $region17
    $region16: #{tpu_custom_call.1} parent=1 // pred_region
      %s168 = ssub.s32 16, 16
      %169 = vsyncadd [#allocation7], %s168
      %s171 = sshll.u32 [#allocation6], 4
      %s172 = int_to_ptr.vmem [resolvable:$true] %s171
      %174 = dma.vmem_to_hbm [thread:$0]  %s172, 16, %s2, [#allocation7]
    $region17: #{tpu_custom_call.1} parent=1 // pred_fallthru
      _
    // Predicated region
    $region18: #{tpu_custom_call.1} parent=1 // pred_check
      _
    $region19: #{tpu_custom_call.1} parent=1 // pred_check_branch
      %176 = sbr.rel (0) target = $region21
    $region20: #{tpu_custom_call.1} parent=1 // pred_region
      %s178 = ssub.s32 16, 16
      %179 = vsyncadd [#allocation7], %s178
      %s181 = sshll.u32 [#allocation8], 4
      %s182 = int_to_ptr.vmem [resolvable:$true] %s181
      %184 = dma.vmem_to_hbm [thread:$0]  %s182, 16, %s3, [#allocation7]
    $region21: #{tpu_custom_call.1} parent=1 // pred_fallthru
      _
    // Predicated region
    $region22: #{tpu_custom_call.1} parent=1 // pred_check
      _
    $region23: #{tpu_custom_call.1} parent=1 // pred_check_branch
      %186 = sbr.rel (0) target = $region25
    $region24: #{tpu_custom_call.1} parent=1 // pred_region
      %187 = dma.done [#allocation4], 256
    $region25: #{tpu_custom_call.1} parent=1 // pred_fallthru
      _
    // Predicated region
    $region26: #{tpu_custom_call.1} parent=1 // pred_check
      _
    $region27: #{tpu_custom_call.1} parent=1 // pred_check_branch
      %189 = sbr.rel (0) target = $region29
    $region28: #{tpu_custom_call.1} parent=1 // pred_region
      %190 = dma.done [#allocation7], 16
    $region29: #{tpu_custom_call.1} parent=1 // pred_fallthru
      _
    // Predicated region
    $region30: #{tpu_custom_call.1} parent=1 // pred_check
      _
    $region31: #{tpu_custom_call.1} parent=1 // pred_check_branch
      %192 = sbr.rel (0) target = $region33
    $region32: #{tpu_custom_call.1} parent=1 // pred_region
      %193 = dma.done [#allocation7], 16
    $region33: #{tpu_custom_call.1} parent=1 // pred_fallthru
      _
    %194 = vsyncpa [#allocation3], 1
    %195 = vsyncpa [#allocation4], 1
    %196 = vsyncpa [#allocation7], 1

</llo_original>
